<compile_context>
chip_gen: v5e
topology: v5e:2x2
jax: 0.10.0
libtpu: 0.0.40
codegen_flags: <defaults>
</compile_context>

<pallas_src>
import functools

import jax
import jax.numpy as jnp
from jax.experimental import pallas as pl
from jax.experimental.pallas import tpu as pltpu


_SUBLANE = 8      # row tiles are multiples of this
_MAX_TM = 2048    # max row tile (multiple of 8/128); amortizes per-step overhead


def _round_up(v, m):
    return ((v + m - 1) // m) * m


def _linear_kernel(x_ref, w_ref, b_ref, o_ref):
    # MXU matmul with f32 accumulation + VPU bias add. w_ref / b_ref use a
    # constant index_map so they stay VMEM-resident across all row tiles;
    # only the X / output tiles stream.
    acc = jnp.dot(x_ref[...], w_ref[...], preferred_element_type=jnp.float32)
    o_ref[...] = (acc + b_ref[...]).astype(o_ref.dtype)


def prepare_params(weight, bias):
    """One-time param prep: fold in the transpose (no per-forward transpose).

    weight: [C, F] float32 (PyTorch Linear layout), bias: [C] float32
    returns (weight_t [F, C] float32, bias2d [1, C] float32).
    """
    w_t = jnp.asarray(weight, dtype=jnp.float32).T
    b2d = jnp.asarray(bias, dtype=jnp.float32).reshape(1, -1)
    return w_t, b2d


@functools.partial(jax.jit, static_argnames=("use_bf16",))
def linear_forward(x, w_t, b2d, *, use_bf16=False):
    """logits = x @ weight.T + bias  (matches torch.nn.Linear semantics).

    x:    [N, F] float32
    w_t:  [F, C] float32 (from prepare_params)
    b2d:  [1, C] float32 (from prepare_params)
    returns [N, C] float32
    """
    n, f = x.shape
    c = w_t.shape[1]

    if use_bf16:
        # Halves the streamed X bytes; accumulation stays f32 in the kernel.
        x = x.astype(jnp.bfloat16)
        w_t = w_t.astype(jnp.bfloat16)

    # Row tile: multiple of 8, capped; for large N make sure there are >= 2
    # row tiles so the "parallel" axis spans both TensorCores on v7x.
    if n <= _SUBLANE:
        tm = n  # single block equal to the full first dim (legal)
    else:
        tm = min(_MAX_TM, _round_up(pl.cdiv(n, 2), _SUBLANE))
    grid = (pl.cdiv(n, tm),)

    # VMEM budget: double-buffered X/out tiles + resident W^T/bias (+margin).
    in_itemsize = 2 if use_bf16 else 4
    vmem_bytes = (2 * tm * f * in_itemsize      # double-buffered X tiles
                  + 2 * tm * c * 4              # double-buffered output tiles
                  + f * c * in_itemsize + c * 4)  # resident W^T + bias
    vmem_limit = min(100 * 1024 * 1024, max(2 * vmem_bytes, 32 * 1024 * 1024))

    out = pl.pallas_call(
        _linear_kernel,
        out_shape=jax.ShapeDtypeStruct((n, c), jnp.float32),
        grid=grid,
        in_specs=[
            pl.BlockSpec((tm, f), lambda i: (i, 0)),   # streamed X row tiles
            pl.BlockSpec((f, c), lambda i: (0, 0)),    # VMEM-resident W^T
            pl.BlockSpec((1, c), lambda i: (0, 0)),    # VMEM-resident bias
        ],
        # Narrow (tm, C) output block: C equals the full last dim (legal). At
        # C=4 this is 32x less HBM write traffic than padding to 128 lanes.
        out_specs=pl.BlockSpec((tm, c), lambda i: (i, 0)),
        compiler_params=pltpu.CompilerParams(
            # Row tiles are independent -> megacore-shardable on v7x.
            dimension_semantics=("parallel",),
            vmem_limit_bytes=vmem_limit,
        ),
    )(x, w_t, b2d)
    return out


class SoftmaxModel:
    """JAX mirror of the PyTorch `Softmax` module (linear logits only)."""

    def __init__(self, num_features, num_classes):
        self.num_classes = num_classes
        # Module __init__ zero-initializes both weight and bias.
        self.weight = jnp.zeros((num_classes, num_features), dtype=jnp.float32)
        self.bias = jnp.zeros((num_classes,), dtype=jnp.float32)
        # Transpose once at init; avoids per-forward weight transpose.
        self._w_t, self._b2d = prepare_params(self.weight, self.bias)

    def forward(self, x):
        return linear_forward(x, self._w_t, self._b2d)

    def accuracy(self, x, y):
        logits = self.forward(x)
        y_pred = jnp.argmax(logits, axis=1)
        acc = jnp.sum(y_pred == y) / x.shape[0]
        return float(acc) * 100.0


if __name__ == "__main__":
    key = jax.random.PRNGKey(0)
    num_features = 32
    num_classes = 4
    batch = 8

    kx, ky, kw, kb, kx2 = jax.random.split(key, 5)
    x = jax.random.normal(kx, (batch, num_features), dtype=jnp.float32)
    y = jax.random.randint(ky, (batch,), 0, num_classes)

    # --- Module-semantics path (zero-initialized Linear, like the PyTorch spec).
    model = SoftmaxModel(num_features, num_classes)
    logits = jax.block_until_ready(model.forward(x))
    assert logits.shape == (batch, num_classes)
    assert jnp.allclose(logits, jnp.zeros_like(logits), atol=1e-6)
    _ = model.accuracy(x, y)  # exercise the argmax path as well

    # --- Non-vacuous correctness check: random weights/bias vs. plain JAX.
    w_rand = jax.random.normal(kw, (num_classes, num_features), dtype=jnp.float32)
    b_rand = jax.random.normal(kb, (num_classes,), dtype=jnp.float32)
    w_t, b2d = prepare_params(w_rand, b_rand)

    got = jax.block_until_ready(linear_forward(x, w_t, b2d))
    ref = x @ w_rand.T + b_rand
    assert got.shape == (batch, num_classes)
    assert jnp.allclose(got, ref, atol=1e-5, rtol=1e-5)

    # --- Ragged-tail path: N not a multiple of the row tile, no jnp.pad copy.
    x_odd = jax.random.normal(kx2, (13, num_features), dtype=jnp.float32)
    got_odd = jax.block_until_ready(linear_forward(x_odd, w_t, b2d))
    ref_odd = x_odd @ w_rand.T + b_rand
    assert got_odd.shape == (13, num_classes)
    assert jnp.allclose(got_odd, ref_odd, atol=1e-5, rtol=1e-5)

    # --- Optional bf16 streaming path (f32 accumulation), looser tolerance.
    got_bf16 = jax.block_until_ready(linear_forward(x, w_t, b2d, use_bf16=True))
    assert jnp.allclose(got_bf16, ref, atol=1e-1, rtol=5e-2)

    print("KERNEL_OK")
</pallas_src>

<mosaic_0001>
module attributes {stable_mosaic.version = 11 : i64} {
  func.func @_linear_kernel(%arg0: i32, %arg1: memref<8x32xf32, #tpu.memory_space<vmem>>, %arg2: memref<32x4xf32, #tpu.memory_space<vmem>>, %arg3: memref<1x4xf32, #tpu.memory_space<vmem>>, %arg4: memref<8x4xf32, #tpu.memory_space<vmem>>) attributes {dimension_semantics = [#tpu.dimension_semantics<parallel>], iteration_bounds = array<i64: 1>, scalar_prefetch = 0 : i64, scratch_operands = 0 : i64, tpu.core_type = #tpu.core_type<tc>, window_params = [{transform_indices = @transform_0, window_bounds = array<i64: 8, 32>}, {pipeline_mode = #tpu.pipeline_mode<synchronous>, transform_indices = @transform_1, window_bounds = array<i64: 32, 4>}, {pipeline_mode = #tpu.pipeline_mode<synchronous>, transform_indices = @transform_2, window_bounds = array<i64: 1, 4>}, {transform_indices = @transform_3, window_bounds = array<i64: 8, 4>}]} {
    %c0 = arith.constant 0 : index
    %c0_0 = arith.constant 0 : index
    %0 = vector.load %arg1[%c0, %c0_0] : memref<8x32xf32, #tpu.memory_space<vmem>>, vector<8x32xf32>
    %c0_1 = arith.constant 0 : index
    %c0_2 = arith.constant 0 : index
    %1 = vector.load %arg2[%c0_1, %c0_2] : memref<32x4xf32, #tpu.memory_space<vmem>>, vector<32x4xf32>
    %cst = arith.constant dense<0.000000e+00> : vector<8x4xf32>
    %2 = tpu.matmul %0, %1, %cst {dimension_numbers = #tpu.dot_dimension_numbers<[1], [0], [0], [1], [0, 0, 1, 1], [], []>} : vector<8x32xf32>, vector<32x4xf32>, vector<8x4xf32> -> vector<8x4xf32>
    %c0_3 = arith.constant 0 : index
    %c0_4 = arith.constant 0 : index
    %3 = vector.load %arg3[%c0_3, %c0_4] : memref<1x4xf32, #tpu.memory_space<vmem>>, vector<1x4xf32>
    %4 = vector.broadcast %3 : vector<1x4xf32> to vector<8x4xf32>
    %5 = arith.addf %2, %4 : vector<8x4xf32>
    %c0_5 = arith.constant 0 : index
    %c0_6 = arith.constant 0 : index
    %6 = vector.load %arg4[%c0_5, %c0_6] : memref<8x4xf32, #tpu.memory_space<vmem>>, vector<8x4xf32>
    tpu.vector_store %arg4[%c0_5, %c0_6], %5 {strides = array<i32>} : memref<8x4xf32, #tpu.memory_space<vmem>>, vector<8x4xf32>,
    return
  }
  func.func @transform_0(%arg0: i32) -> (i32, i32) {
    %c0_i32 = arith.constant 0 : i32
    %c0_i32_0 = arith.constant 0 : i32
    return %arg0, %c0_i32 : i32, i32
  }
  func.func @transform_1(%arg0: i32) -> (i32, i32) {
    %c0_i32 = arith.constant 0 : i32
    %c0_i32_0 = arith.constant 0 : i32
    %c0_i32_1 = arith.constant 0 : i32
    return %c0_i32, %c0_i32_0 : i32, i32
  }
  func.func @transform_2(%arg0: i32) -> (i32, i32) {
    %c0_i32 = arith.constant 0 : i32
    %c0_i32_0 = arith.constant 0 : i32
    %c0_i32_1 = arith.constant 0 : i32
    return %c0_i32, %c0_i32_0 : i32, i32
  }
  func.func @transform_3(%arg0: i32) -> (i32, i32) {
    %c0_i32 = arith.constant 0 : i32
    %c0_i32_0 = arith.constant 0 : i32
    return %arg0, %c0_i32 : i32, i32
  }
}

</mosaic_0001>

<llo_original>
// kernel: linear_forward.1
$region0: #{linear_forward.1}
  #allocation0 [shape = 'u32[]', space=smem, size = 0x4, offset = 0x4, fixed_abs, tag = 'smem constant byte address 0x4 - core index']
  #allocation1 [shape = 'u32[72,128]{1,0:T(1,128)}', space=vmem, size = 0x9000, scoped, tag = 'internal scratch']
  %s0 = inlined_call_operand.vmem [shape: f32[8,32], index: 0, kind: input, shape index: {}]
  %s1 = inlined_call_operand.vmem [shape: f32[32,4], index: 1, kind: input, shape index: {}]
  %s2 = inlined_call_operand.vmem [shape: f32[1,4], index: 2, kind: input, shape index: {}]
  %s3 = inlined_call_operand.vmem [shape: f32[8,4], index: 3, kind: output, shape index: {}]
  %s4 = sld [smem:[#allocation0]]
  $region22: #{linear_forward.1} parent=0
    _
  %s6 = ssub.s32 1, %s4
  %s7 = scalar_select 0, %s6, %s4
  // Predicated region
  $region2: #{linear_forward.1} parent=0 // pred_check
    _
  $region3: #{linear_forward.1} parent=0 // pred_check_branch
    %9 = sbr.rel (0) target = $region5
  $region4: #{linear_forward.1} parent=0 // pred_region
    _
  $region5: #{linear_forward.1} parent=0 // pred_fallthru
    _
  // Predicated region
  $region6: #{linear_forward.1} parent=0 // pred_check
    _
  $region7: #{linear_forward.1} parent=0 // pred_check_branch
    %11 = sbr.rel (0) target = $region9
  $region8: #{linear_forward.1} parent=0 // pred_region
    _
  $region9: #{linear_forward.1} parent=0 // pred_fallthru
    _
  // Predicated region
  $region10: #{linear_forward.1} parent=0 // pred_check
    _
  $region11: #{linear_forward.1} parent=0 // pred_check_branch
    %13 = sbr.rel (0) target = $region13
  $region12: #{linear_forward.1} parent=0 // pred_region
    _
  $region13: #{linear_forward.1} parent=0 // pred_fallthru
    _
  %v14 = vld [vmem:[%s0] sm:$0xff]
  %v15 = vld [vmem:[%s1] sm:$0xff]
  %v16 = vld [vmem:[%s1 + $0x8] sm:$0xff]
  %v17 = vld [vmem:[%s1 + $0x10] sm:$0xff]
  %v18 = vld [vmem:[%s1 + $0x18] sm:$0xff]
  %v19 = vld [vmem:[%s2] sm:$0x1]
  %v21 = vperm.slane %v19, 0
  %vm23 = vcmask 261120
  %v25 = vsel %vm23, %v14, 0
  %27 = vmatpush.msra.mxu0 0.0
  %28 = vmatpush.msra.mxu0 0.0
  %29 = vmatpush.msra.mxu0 0.0
  %30 = vmatpush.msra.mxu0 0.0
  %31 = vmatpush.msra.mxu0 0.0
  %32 = vmatpush.msra.mxu0 0.0
  %33 = vmatpush.msra.mxu0 0.0
  %34 = vmatpush.msra.mxu0 0.0
  %35 = vmatpush.msra.mxu0 0.0
  %36 = vmatpush.msra.mxu0 0.0
  %37 = vmatpush.msra.mxu0 0.0
  %38 = vmatpush.msra.mxu0 0.0
  %39 = vmatpush.msra.mxu0 %v18
  %40 = vmatpush.msra.mxu0 %v17
  %41 = vmatpush.msra.mxu0 %v16
  %42 = vmatpush.msra.mxu0 %v15
  %43 = vmatmul.f32.gmra.mxu0 %v25
  %v44 = vpop.f32.mrf.mxu0
  %v45 = vadd.f32 %v21, %v44
  %46 = vdwg.mxu0
  %vm47 = vcmask 31744
  %48 = vst.msk [vmem:[%s3] sm:$0xff] %vm47, %v45
  // Predicated region
  $region14: #{linear_forward.1} parent=0 // pred_check
    _
  $region15: #{linear_forward.1} parent=0 // pred_check_branch
    %50 = sbr.rel (0) target = $region17
  $region16: #{linear_forward.1} parent=0 // pred_region
    _
  $region17: #{linear_forward.1} parent=0 // pred_fallthru
    _
  // Predicated region
  $region18: #{linear_forward.1} parent=0 // pred_check
    _
  $region19: #{linear_forward.1} parent=0 // pred_check_branch
    %52 = sbr.rel (0) target = $region21
  $region20: #{linear_forward.1} parent=0 // pred_region
    _
  $region21: #{linear_forward.1} parent=0 // pred_fallthru
    _

</llo_original>
